<compile_context>
chip_gen: v6e
topology: v6e:2x2x1
jax: 0.10.0
libtpu: 0.0.40
codegen_flags: <defaults>
</compile_context>

<pallas_src>
import jax
import jax.numpy as jnp
from jax.experimental import pallas as pl
from jax.experimental.pallas import tpu as pltpu


def _round_up(x, m):
    return ((x + m - 1) // m) * m


# ---------------------------------------------------------------------------
# Kernels
# ---------------------------------------------------------------------------
def _projector_kernel_fused(x_ref, w_ref, b_ref, o_ref):
    """Collapsed-K: one (tm, tn) output tile per grid step, full reduction."""
    y = jnp.dot(x_ref[...], w_ref[...], preferred_element_type=jnp.float32)
    y = y + b_ref[...]
    # sigmoid(y) == 0.5 * (tanh(y/2) + 1): single EUP op, no inf intermediate.
    o_ref[...] = (0.5 * (jnp.tanh(0.5 * y) + 1.0)).astype(o_ref.dtype)


def _projector_kernel_kloop(x_ref, w_ref, b_ref, o_ref, acc_ref):
    """K-loop fallback (very large F): f32 accumulator, bias folded into init."""
    k = pl.program_id(2)

    @pl.when(k == 0)
    def _():
        acc_ref[...] = jnp.broadcast_to(b_ref[...], acc_ref.shape)

    acc_ref[...] += jnp.dot(
        x_ref[...], w_ref[...], preferred_element_type=jnp.float32
    )

    @pl.when(k == pl.num_programs(2) - 1)
    def _():
        o_ref[...] = (0.5 * (jnp.tanh(0.5 * acc_ref[...]) + 1.0)).astype(
            o_ref.dtype
        )


# ---------------------------------------------------------------------------
# Tile / VMEM sizing
# ---------------------------------------------------------------------------
_VMEM_BUDGET = 28 * 1024 * 1024  # stay well under v7x's 64 MiB physical VMEM


def _vmem_bytes(tm, tn, tk, out_bytes, kloop):
    b = 2 * (tm * tk * 2 + tk * tn * 2)   # bf16 operand tiles, double-buffered
    b += 2 * tn * 4                       # bias slice (f32), double-buffered
    b += 2 * tm * tn * out_bytes          # output tile, double-buffered
    if kloop:
        b += tm * tn * 4                  # f32 accumulator scratch
    return b


def _choose_config(B, F_pad, out_bytes):
    # Lane-dense output: tn multiple of 128; prefer 256 (full v6e MXU pass).
    tn = 256 if F_pad % 256 == 0 else 128

    # Raise tm for large batches: halves W re-streaming per doubling.
    if B >= 512:
        tm = 512
    elif B >= 256:
        tm = 256
    else:
        tm = _round_up(B, 8)

    # Prefer collapsing the K axis entirely (tk = F_pad): no accumulator
    # traffic, no init/finalize branches, fewest grid steps.
    tk = F_pad
    kloop = False
    while (_vmem_bytes(tm, tn, tk, out_bytes, False) > _VMEM_BUDGET
           and tm > 128 and tm % 16 == 0):
        tm //= 2
    if _vmem_bytes(tm, tn, tk, out_bytes, False) > _VMEM_BUDGET:
        # Very large F: keep a K loop with the largest tk that fits the budget.
        kloop = True
        tk = 128
        for cand in (4096, 2048, 1024, 512, 256, 128):
            if (F_pad % cand == 0
                    and _vmem_bytes(tm, tn, cand, out_bytes, True) <= _VMEM_BUDGET):
                tk = cand
                break

    B_pad = _round_up(B, tm)

    # v7x has 2 TensorCores; make sure the parallel grid has >= 2 tiles.
    if (B_pad // tm) * (F_pad // tn) == 1:
        if F_pad // 128 >= 2:
            tn = 128
        elif tm >= 16 and (tm // 2) % 8 == 0:
            tm //= 2

    return tm, tn, tk, kloop, B_pad


# ---------------------------------------------------------------------------
# Module
# ---------------------------------------------------------------------------
class Projector:
    """sigmoid(x @ weight.T + bias), matching PyTorch nn.Linear + Sigmoid.

    Parameters are prepped once at construction (transpose, zero-pad to
    lane-dense multiples of 128, cast to the MXU dtype) so each forward call
    only streams the already-prepped weight through the kernel.
    """

    def __init__(self, weight, bias, *, compute_dtype=jnp.bfloat16,
                 xla_fastpath_elems=4096):
        F = weight.shape[0]
        assert weight.shape == (F, F) and bias.shape == (F,)
        self.feature_size = F
        self.weight = weight          # kept for the tiny-shape XLA fast path
        self.bias = bias
        self.compute_dtype = compute_dtype
        self.xla_fastpath_elems = xla_fastpath_elems

        F_pad = _round_up(F, 128)
        self.F_pad = F_pad
        # One-time HBM-side prep (cached): kernel computes x @ W with no
        # in-kernel transpose, and the pallas_call is the only per-step W read.
        self.w_prepped = (
            jnp.zeros((F_pad, F_pad), compute_dtype)
            .at[:F, :F].set(weight.T.astype(compute_dtype))
        )
        self.b_prepped = (
            jnp.zeros((1, F_pad), jnp.float32)
            .at[0, :F].set(bias.astype(jnp.float32))
        )

    def __call__(self, x, *, force_pallas=False):
        B, F = x.shape
        assert F == self.feature_size
        out_dtype = x.dtype

        # Tiny-shape fast path: a fused XLA dot+sigmoid beats any pallas_call
        # at launch/DMA-latency sizes.
        if not force_pallas and B * F <= self.xla_fastpath_elems:
            return jax.nn.sigmoid(x @ self.weight.T + self.bias)

        F_pad = self.F_pad
        out_bytes = jnp.dtype(out_dtype).itemsize
        tm, tn, tk, kloop, B_pad = _choose_config(B, F_pad, out_bytes)

        # Pad / cast activations (skip the padding copy when already aligned).
        if B_pad == B and F_pad == F:
            x_p = x.astype(self.compute_dtype)
        else:
            x_p = (
                jnp.zeros((B_pad, F_pad), self.compute_dtype)
                .at[:B, :F].set(x.astype(self.compute_dtype))
            )

        vmem_est = _vmem_bytes(tm, tn, tk, out_bytes, kloop)
        sem = ("parallel", "parallel") + (("arbitrary",) if kloop else ())
        cparams = pltpu.CompilerParams(
            dimension_semantics=sem,
            vmem_limit_bytes=int(min(64 << 20, max(32 << 20, 2 * vmem_est))),
        )

        if not kloop:
            grid = (B_pad // tm, F_pad // tn)
            out = pl.pallas_call(
                _projector_kernel_fused,
                out_shape=jax.ShapeDtypeStruct((B_pad, F_pad), out_dtype),
                grid_spec=pltpu.PrefetchScalarGridSpec(
                    num_scalar_prefetch=0,
                    grid=grid,
                    in_specs=[
                        pl.BlockSpec((tm, tk), lambda i, j: (i, 0)),   # x row slab
                        pl.BlockSpec((tk, tn), lambda i, j: (0, j)),   # W^T col slab
                        pl.BlockSpec((1, tn), lambda i, j: (0, j)),    # bias slice
                    ],
                    out_specs=pl.BlockSpec((tm, tn), lambda i, j: (i, j)),
                ),
                compiler_params=cparams,
            )(x_p, self.w_prepped, self.b_prepped)
        else:
            grid = (B_pad // tm, F_pad // tn, F_pad // tk)
            out = pl.pallas_call(
                _projector_kernel_kloop,
                out_shape=jax.ShapeDtypeStruct((B_pad, F_pad), out_dtype),
                grid_spec=pltpu.PrefetchScalarGridSpec(
                    num_scalar_prefetch=0,
                    grid=grid,
                    in_specs=[
                        pl.BlockSpec((tm, tk), lambda i, j, k: (i, k)),
                        pl.BlockSpec((tk, tn), lambda i, j, k: (k, j)),
                        pl.BlockSpec((1, tn), lambda i, j, k: (0, j)),
                    ],
                    out_specs=pl.BlockSpec((tm, tn), lambda i, j, k: (i, j)),
                    scratch_shapes=[pltpu.VMEM((tm, tn), jnp.float32)],
                ),
                compiler_params=cparams,
            )(x_p, self.w_prepped, self.b_prepped)

        if B_pad == B and F_pad == F:
            return out
        return out[:B, :F]


if __name__ == "__main__":
    key = jax.random.PRNGKey(0)
    k1, k2, k3, k4, k5, k6 = jax.random.split(key, 6)

    # --- Test 1: spec-sized small case (feature_size=32, batch=8) -----------
    # force_pallas=True so the Pallas kernel (not the XLA fast path) runs.
    feature_size, batch = 32, 8
    bound = 1.0 / (feature_size ** 0.5)
    weight = jax.random.uniform(
        k1, (feature_size, feature_size), jnp.float32, -bound, bound)
    bias = jax.random.uniform(k2, (feature_size,), jnp.float32, -bound, bound)
    x = jax.random.normal(k3, (batch, feature_size), jnp.float32)

    proj = Projector(weight, bias)
    out = jax.block_until_ready(proj(x, force_pallas=True))
    ref = jax.nn.sigmoid(x @ weight.T + bias)
    assert out.shape == (batch, feature_size)
    assert jnp.allclose(out, ref, atol=1e-2, rtol=1e-2), (
        float(jnp.max(jnp.abs(out - ref))))

    # --- Test 2: non-trivial tiling (padding + multi-tile N grid, collapsed K)
    feature_size2, batch2 = 384, 100
    bound2 = 1.0 / (feature_size2 ** 0.5)
    weight2 = jax.random.uniform(
        k4, (feature_size2, feature_size2), jnp.float32, -bound2, bound2)
    bias2 = jax.random.uniform(k5, (feature_size2,), jnp.float32, -bound2, bound2)
    x2 = jax.random.normal(k6, (batch2, feature_size2), jnp.float32)

    proj2 = Projector(weight2, bias2)
    out2 = jax.block_until_ready(proj2(x2, force_pallas=True))
    # Reference with the same bf16 input rounding (kernel accumulates in f32).
    xb = x2.astype(jnp.bfloat16).astype(jnp.float32)
    wb = weight2.astype(jnp.bfloat16).astype(jnp.float32)
    ref2 = jax.nn.sigmoid(xb @ wb.T + bias2)
    assert out2.shape == (batch2, feature_size2)
    assert jnp.allclose(out2, ref2, atol=2e-3, rtol=2e-3), (
        float(jnp.max(jnp.abs(out2 - ref2))))

    print("KERNEL_OK")
</pallas_src>

<mosaic_0001>
module attributes {stable_mosaic.version = 11 : i64} {
  func.func @_projector_kernel_fused(%arg0: i32, %arg1: i32, %arg2: memref<8x128xbf16, #tpu.memory_space<vmem>>, %arg3: memref<128x128xbf16, #tpu.memory_space<vmem>>, %arg4: memref<1x128xf32, #tpu.memory_space<vmem>>, %arg5: memref<8x128xf32, #tpu.memory_space<vmem>>) attributes {dimension_semantics = [#tpu.dimension_semantics<parallel>, #tpu.dimension_semantics<parallel>], iteration_bounds = array<i64: 1, 1>, scalar_prefetch = 0 : i64, scratch_operands = 0 : i64, tpu.core_type = #tpu.core_type<tc>, window_params = [{transform_indices = @transform_0, window_bounds = array<i64: 8, 128>}, {transform_indices = @transform_1, window_bounds = array<i64: 128, 128>}, {transform_indices = @transform_2, window_bounds = array<i64: 1, 128>}, {transform_indices = @transform_3, window_bounds = array<i64: 8, 128>}]} {
    %c0 = arith.constant 0 : index
    %c0_0 = arith.constant 0 : index
    %0 = vector.load %arg2[%c0, %c0_0] : memref<8x128xbf16, #tpu.memory_space<vmem>>, vector<8x128xbf16>
    %c0_1 = arith.constant 0 : index
    %c0_2 = arith.constant 0 : index
    %1 = vector.load %arg3[%c0_1, %c0_2] : memref<128x128xbf16, #tpu.memory_space<vmem>>, vector<128x128xbf16>
    %cst = arith.constant dense<0.000000e+00> : vector<8x128xf32>
    %2 = tpu.matmul %0, %1, %cst {dimension_numbers = #tpu.dot_dimension_numbers<[1], [0], [0], [1], [0, 0, 1, 1], [], []>} : vector<8x128xbf16>, vector<128x128xbf16>, vector<8x128xf32> -> vector<8x128xf32>
    %c0_3 = arith.constant 0 : index
    %c0_4 = arith.constant 0 : index
    %3 = vector.load %arg4[%c0_3, %c0_4] : memref<1x128xf32, #tpu.memory_space<vmem>>, vector<1x128xf32>
    %4 = vector.broadcast %3 : vector<1x128xf32> to vector<8x128xf32>
    %5 = arith.addf %2, %4 : vector<8x128xf32>
    %cst_5 = arith.constant 5.000000e-01 : f32
    %6 = vector.broadcast %cst_5 : f32 to vector<8x128xf32>
    %7 = arith.mulf %6, %5 : vector<8x128xf32>
    %8 = math.tanh %7 : vector<8x128xf32>
    %cst_6 = arith.constant 1.000000e+00 : f32
    %9 = vector.broadcast %cst_6 : f32 to vector<8x128xf32>
    %10 = arith.addf %8, %9 : vector<8x128xf32>
    %cst_7 = arith.constant 5.000000e-01 : f32
    %11 = vector.broadcast %cst_7 : f32 to vector<8x128xf32>
    %12 = arith.mulf %11, %10 : vector<8x128xf32>
    %c0_8 = arith.constant 0 : index
    %c0_9 = arith.constant 0 : index
    %13 = vector.load %arg5[%c0_8, %c0_9] : memref<8x128xf32, #tpu.memory_space<vmem>>, vector<8x128xf32>
    tpu.vector_store %arg5[%c0_8, %c0_9], %12 {strides = array<i32>} : memref<8x128xf32, #tpu.memory_space<vmem>>, vector<8x128xf32>,
    return
  }
  func.func @transform_0(%arg0: i32, %arg1: i32) -> (i32, i32) {
    %c0_i32 = arith.constant 0 : i32
    %c0_i32_0 = arith.constant 0 : i32
    return %arg0, %c0_i32 : i32, i32
  }
  func.func @transform_1(%arg0: i32, %arg1: i32) -> (i32, i32) {
    %c0_i32 = arith.constant 0 : i32
    %c0_i32_0 = arith.constant 0 : i32
    return %c0_i32, %arg1 : i32, i32
  }
  func.func @transform_2(%arg0: i32, %arg1: i32) -> (i32, i32) {
    %c0_i32 = arith.constant 0 : i32
    %c0_i32_0 = arith.constant 0 : i32
    return %c0_i32, %arg1 : i32, i32
  }
  func.func @transform_3(%arg0: i32, %arg1: i32) -> (i32, i32) {
    %c0_i32 = arith.constant 0 : i32
    return %arg0, %arg1 : i32, i32
  }
}

</mosaic_0001>

<llo_original>
// kernel: tpu_custom_call.1
$region0: #{tpu_custom_call.1}
  #allocation0 [shape = 'u32[]', space=smem, size = 0x4, offset = 0x4, fixed_abs, tag = 'smem constant byte address 0x4 - core index']
  #allocation1 [shape = 'u32[144,128]{1,0:T(1,128)}', space=vmem, size = 0x12000, scoped, tag = 'internal scratch']
  %s0 = inlined_call_operand.hbm [shape: bf16[8,128], index: 0, kind: input, shape index: {}]
  %s1 = inlined_call_operand.hbm [shape: bf16[128,128], index: 1, kind: input, shape index: {}]
  %s2 = inlined_call_operand.vmem [shape: f32[1,128], index: 2, kind: input, shape index: {}]
  %s3 = inlined_call_operand.hbm [shape: f32[8,128], index: 3, kind: output, shape index: {}]
  %s4 = sld [smem:[#allocation0]]
  $region30: #{tpu_custom_call.1} parent=0
    _
  %s6 = ssub.s32 1, %s4
  %s7 = scalar_select 0, %s6, %s4
  $region1: #{tpu_custom_call.1} parent=0
    #allocation2 [shape = 'u8[2048]{0}', space=vmem, size = 0x800, scoped, tag = 'input window, operand 0, single buffered']
    #allocation3 [shape = 's32[1]{0}', space=sflag, size = 0x4, scoped, tag = 'scoped memory for tpu_custom_call.1']
    #allocation4 [shape = 's32[1]{0}', space=sflag, size = 0x4, scoped, tag = 'scoped memory for tpu_custom_call.1']
    #allocation5 [shape = 'u8[32768]{0}', space=vmem, size = 0x8000, scoped, tag = 'input window, operand 1, single buffered']
    #allocation6 [shape = 's32[1]{0}', space=sflag, size = 0x4, scoped, tag = 'scoped memory for tpu_custom_call.1']
    #allocation7 [shape = 'u8[4096]{0}', space=vmem, size = 0x1000, scoped, tag = 'output window, operand 0, single buffered']
    %8 = vsyncpa [#allocation3], 0
    %9 = vsyncpa [#allocation6], 0
    %10 = vsyncpa [#allocation4], 0
    // Predicated region
    $region2: #{tpu_custom_call.1} parent=1 // pred_check
      _
    $region3: #{tpu_custom_call.1} parent=1 // pred_check_branch
      %12 = sbr.rel (0) target = $region5
    $region4: #{tpu_custom_call.1} parent=1 // pred_region
      %s14 = ssub.s32 64, 64
      %15 = vsyncadd [#allocation3], %s14
      %s17 = sshll.u32 [#allocation2], 4
      %s18 = int_to_ptr.vmem [resolvable:$true] %s17
      %20 = dma.hbm_to_vmem [thread:$0]  %s0, 64, %s18, [#allocation3]
    $region5: #{tpu_custom_call.1} parent=1 // pred_fallthru
      _
    // Predicated region
    $region6: #{tpu_custom_call.1} parent=1 // pred_check
      _
    $region7: #{tpu_custom_call.1} parent=1 // pred_check_branch
      %22 = sbr.rel (0) target = $region9
    $region8: #{tpu_custom_call.1} parent=1 // pred_region
      %s24 = ssub.s32 1024, 1024
      %25 = vsyncadd [#allocation6], %s24
      %s26 = sshll.u32 [#allocation5], 4
      %s27 = int_to_ptr.vmem [resolvable:$true] %s26
      %32 = dma.hbm_to_vmem [thread:$0]  %s1, 1024, %s27, [#allocation6], 64, 64, 4
    $region9: #{tpu_custom_call.1} parent=1 // pred_fallthru
      _
    // Predicated region
    $region10: #{tpu_custom_call.1} parent=1 // pred_check
      _
    $region11: #{tpu_custom_call.1} parent=1 // pred_check_branch
      %34 = sbr.rel (0) target = $region13
    $region12: #{tpu_custom_call.1} parent=1 // pred_region
      _
    $region13: #{tpu_custom_call.1} parent=1 // pred_fallthru
      _
    // Predicated region
    $region14: #{tpu_custom_call.1} parent=1 // pred_check
      _
    $region15: #{tpu_custom_call.1} parent=1 // pred_check_branch
      %36 = sbr.rel (0) target = $region17
    $region16: #{tpu_custom_call.1} parent=1 // pred_region
      %37 = dma.done [#allocation3], 64
    $region17: #{tpu_custom_call.1} parent=1 // pred_fallthru
      _
    // Predicated region
    $region18: #{tpu_custom_call.1} parent=1 // pred_check
      _
    $region19: #{tpu_custom_call.1} parent=1 // pred_check_branch
      %39 = sbr.rel (0) target = $region21
    $region20: #{tpu_custom_call.1} parent=1 // pred_region
      %40 = dma.done [#allocation6], 1024
    $region21: #{tpu_custom_call.1} parent=1 // pred_fallthru
      _
    %v42 = vld [vmem:[#allocation2] sm:$0xf]
    %v43 = vld [vmem:[#allocation5] sm:$0xf]
    %v44 = vld [vmem:[#allocation5 + $0x4] sm:$0xf]
    %v45 = vld [vmem:[#allocation5 + $0x8] sm:$0xf]
    %v46 = vld [vmem:[#allocation5 + $0xc] sm:$0xf]
    %v47 = vld [vmem:[#allocation5 + $0x10] sm:$0xf]
    %v48 = vld [vmem:[#allocation5 + $0x14] sm:$0xf]
    %v49 = vld [vmem:[#allocation5 + $0x18] sm:$0xf]
    %v50 = vld [vmem:[#allocation5 + $0x1c] sm:$0xf]
    %v51 = vld [vmem:[#allocation5 + $0x20] sm:$0xf]
    %v52 = vld [vmem:[#allocation5 + $0x24] sm:$0xf]
    %v53 = vld [vmem:[#allocation5 + $0x28] sm:$0xf]
    %v54 = vld [vmem:[#allocation5 + $0x2c] sm:$0xf]
    %v55 = vld [vmem:[#allocation5 + $0x30] sm:$0xf]
    %v56 = vld [vmem:[#allocation5 + $0x34] sm:$0xf]
    %v57 = vld [vmem:[#allocation5 + $0x38] sm:$0xf]
    %v58 = vld [vmem:[#allocation5 + $0x3c] sm:$0xf]
    %v59 = vld [vmem:[%s2] sm:$0x1]
    %v61 = vlaneseq
    %v62 = vshrl.u32 %v61, 7
    %v63 = vsub.s32 0, %v62
    %v64 = vrot.slane %v59, %v63
    %v82 = vunpack.c.l.b16 %v43
    %v83 = vunpack.c.l.b16 %v44
    %v84 = vunpack.c.l.b16 %v45
    %v85 = vunpack.c.l.b16 %v46
    %v86 = vunpack.c.l.b16 %v47
    %v87 = vunpack.c.l.b16 %v48
    %v88 = vunpack.c.l.b16 %v49
    %v89 = vunpack.c.l.b16 %v50
    %v90 = vunpack.c.l.b16 %v51
    %v91 = vunpack.c.l.b16 %v52
    %v92 = vunpack.c.l.b16 %v53
    %v93 = vunpack.c.l.b16 %v54
    %v94 = vunpack.c.l.b16 %v55
    %v95 = vunpack.c.l.b16 %v56
    %v96 = vunpack.c.l.b16 %v57
    %v97 = vunpack.c.l.b16 %v58
    %v98 = vpack.c.b16 %v83, %v82
    %v99 = vpack.c.b16 %v85, %v84
    %v100 = vpack.c.b16 %v87, %v86
    %v101 = vpack.c.b16 %v89, %v88
    %v102 = vpack.c.b16 %v91, %v90
    %v103 = vpack.c.b16 %v93, %v92
    %v104 = vpack.c.b16 %v95, %v94
    %v105 = vpack.c.b16 %v97, %v96
    %114 = vmatprep.subr.bf16.mxu0 0
    %115 = vmatpush1.bf16.msra.mxu0 %v105
    %116 = vmatprep.subr.bf16.mxu0 0
    %117 = vmatpush1.bf16.msra.mxu0 %v104
    %118 = vmatprep.subr.bf16.mxu0 0
    %119 = vmatpush1.bf16.msra.mxu0 %v103
    %120 = vmatprep.subr.bf16.mxu0 0
    %121 = vmatpush1.bf16.msra.mxu0 %v102
    %122 = vmatprep.subr.bf16.mxu0 0
    %123 = vmatpush1.bf16.msra.mxu0 %v101
    %124 = vmatprep.subr.bf16.mxu0 0
    %125 = vmatpush1.bf16.msra.mxu0 %v100
    %126 = vmatprep.subr.bf16.mxu0 0
    %127 = vmatpush1.bf16.msra.mxu0 %v99
    %128 = vmatprep.subr.bf16.mxu0 0
    %129 = vmatpush1.bf16.msra.mxu0 %v98
    %130 = vmatprep.subr.bf16.mxu0 0
    %131 = vmatpush2.bf16.msra.mxu0 0
    %132 = vmatprep.subr.bf16.mxu0 0
    %133 = vmatpush2.bf16.msra.mxu0 0
    %134 = vmatprep.subr.bf16.mxu0 0
    %135 = vmatpush2.bf16.msra.mxu0 0
    %136 = vmatprep.subr.bf16.mxu0 0
    %137 = vmatpush2.bf16.msra.mxu0 0
    %138 = vmatprep.subr.bf16.mxu0 0
    %139 = vmatpush2.bf16.msra.mxu0 0
    %140 = vmatprep.subr.bf16.mxu0 0
    %141 = vmatpush2.bf16.msra.mxu0 0
    %142 = vmatprep.subr.bf16.mxu0 0
    %143 = vmatpush2.bf16.msra.mxu0 0
    %144 = vmatprep.subr.bf16.mxu0 0
    %145 = vmatpush2.bf16.msra.mxu0 0
    %146 = vmatprep.mubr.bf16.mxu0 0
    %147 = vmatmul.mubr.bf16.gmra.mxu0 %v42
    %v148 = vpop.f32.mrf.mxu0
    %v149 = vadd.f32 %v64, %v148
    %v150 = vpop.f32.mrf.mxu0
    %v151 = vpop.f32.mrf.mxu0
    %v152 = vpop.f32.mrf.mxu0
    %153 = vdwg.mxu0
    %v154 = vmul.f32 %v149, 0.5
    %v155 = vtanh.pop %v154
    %v156 = vadd.f32 %v155, 1.0
    %v157 = vmul.f32 %v156, 0.5
    %158 = vst [vmem:[#allocation7] sm:$0xff] %v157
    // Predicated region
    $region22: #{tpu_custom_call.1} parent=1 // pred_check
      _
    $region23: #{tpu_custom_call.1} parent=1 // pred_check_branch
      %160 = sbr.rel (0) target = $region25
    $region24: #{tpu_custom_call.1} parent=1 // pred_region
      %s162 = ssub.s32 128, 128
      %163 = vsyncadd [#allocation4], %s162
      %s165 = sshll.u32 [#allocation7], 4
      %s166 = int_to_ptr.vmem [resolvable:$true] %s165
      %168 = dma.vmem_to_hbm [thread:$0]  %s166, 128, %s3, [#allocation4]
    $region25: #{tpu_custom_call.1} parent=1 // pred_fallthru
      _
    // Predicated region
    $region26: #{tpu_custom_call.1} parent=1 // pred_check
      _
    $region27: #{tpu_custom_call.1} parent=1 // pred_check_branch
      %170 = sbr.rel (0) target = $region29
    $region28: #{tpu_custom_call.1} parent=1 // pred_region
      %171 = dma.done [#allocation4], 128
    $region29: #{tpu_custom_call.1} parent=1 // pred_fallthru
      _
    %172 = vsyncpa [#allocation3], 1
    %173 = vsyncpa [#allocation6], 1
    %174 = vsyncpa [#allocation4], 1

</llo_original>
